<compile_context>
chip_gen: v6e
topology: v6e:2x2x1
jax: 0.10.0
libtpu: 0.0.40
codegen_flags: <defaults>
</compile_context>

<pallas_src>
import jax
import jax.numpy as jnp
from jax.experimental import pallas as pl
from jax.experimental.pallas import tpu as pltpu


def moe_kernel(x_ref, adapt_ref, wgt_ref, bg_ref, w_ref, b_ref, out_ref):
    B, D = x_ref.shape
    A = adapt_ref.shape[1]
    E = wgt_ref.shape[1]
    ED = E * D
    OUT_W = out_ref.shape[1]          # == ED == 128 (lane-dense slab)

    x = x_ref[...]                    # (B, D)   f32
    adapt = adapt_ref[...]            # (B, A)   f32

    # ---- gating: softmax over experts + per-row entropy (computed once) ----
    logits = jnp.dot(adapt, wgt_ref[...],
                     preferred_element_type=jnp.float32,
                     precision=jax.lax.Precision.HIGHEST) + bg_ref[...]   # (B, E)
    m = jnp.max(logits, axis=-1, keepdims=True)
    ex = jnp.exp(logits - m)
    p = ex / jnp.sum(ex, axis=-1, keepdims=True)                          # (B, E)
    ent = -jnp.sum(p * jnp.log2(p + 1e-12), axis=-1, keepdims=True)       # (B, 1)

    # ---- K-augmented input: x_aug[b, D + a*D + i] = adapt[b, a] * x[b, i] ----
    chunks = [x] + [adapt[:, a:a + 1] * x for a in range(A)]
    x_aug = jnp.concatenate(chunks, axis=1).astype(jnp.bfloat16)          # (B, (1+A)*D)

    # ---- ONE MXU matmul (bf16 operands, f32 accumulate) -> per-expert outputs ----
    # y[b, e*D + o] = static + adaptive + bias, lane-dense (B, E*D)
    y = jnp.dot(x_aug, w_ref[...],
                preferred_element_type=jnp.float32) + b_ref[...]          # (B, ED)

    # ---- gate-weighted combine: 1 VPU mul + log2(E) XLU roll/add steps ----
    p_exp = jnp.concatenate(
        [jnp.broadcast_to(p[:, e:e + 1], (B, D)) for e in range(E)], axis=1)  # (B, ED)
    z = p_exp * y
    step = ED // 2
    while step >= D:                 # tree-reduce the E groups of D lanes
        z = z + pltpu.roll(z, shift=ED - step, axis=1)
        step //= 2
    # lanes [0, D) of z now hold sum_e p[b,e] * y[b, e*D + o]

    # ---- single lane-dense store: [0,D) = output, [D, OUT_W) = per-row entropy ----
    out_ref[...] = jnp.concatenate(
        [z[:, :D], jnp.broadcast_to(ent, (B, OUT_W - D))], axis=1)


def pack_moe_params(params):
    """One-time host-side repacking of MoE parameters (hoisted out of the call path)."""
    E, D, _ = params["w"].shape
    A = params["wa"].shape[-1]
    ED = E * D

    wg_t = params["wg"].T                                              # (A, E)
    bg = params["bg"][None, :]                                         # (1, E)

    # Static weights with the adapt-proj bias folded in: w_eff = W + reshape(ba)
    w_eff = params["w"] + params["ba"].reshape(E, D, D)                 # (E, O, I)
    # w_stat[i, e*D + o] = w_eff[e, o, i]
    w_stat = jnp.transpose(w_eff, (2, 0, 1)).reshape(D, ED)             # (I, E*O)

    # Adaptive weights in K-augmented layout:
    #   big_w[D + a*D + i, e*D + o] = wa[e, o*D + i, a]
    wa4 = params["wa"].reshape(E, D, D, A)                              # (E, O, I, A)
    w_adapt = jnp.transpose(wa4, (3, 2, 0, 1)).reshape(A * D, ED)       # (A*I, E*O)

    big_w = jnp.concatenate([w_stat, w_adapt], axis=0).astype(jnp.bfloat16)  # ((1+A)*D, ED)
    b_all = params["b"].reshape(1, ED)                                  # (1, E*O)
    return {"wg_t": wg_t, "bg": bg, "big_w": big_w, "b_all": b_all}


@jax.jit
def mixture_of_experts(x, adapt_input, packed):
    B, D = x.shape
    A = adapt_input.shape[-1]
    E = packed["bg"].shape[-1]
    ED = E * D
    K = (1 + A) * D
    # Lane-density / roll-reduce assumptions; a config change must retile.
    assert ED == 128, "epilogue assumes num_experts * expert_dim == 128"
    assert E & (E - 1) == 0, "roll tree-reduce assumes power-of-two num_experts"

    slab = pl.pallas_call(
        moe_kernel,
        grid=(1,),
        in_specs=[
            pl.BlockSpec((B, D), lambda i: (0, 0)),
            pl.BlockSpec((B, A), lambda i: (0, 0)),
            pl.BlockSpec((A, E), lambda i: (0, 0)),
            pl.BlockSpec((1, E), lambda i: (0, 0)),
            pl.BlockSpec((K, ED), lambda i: (0, 0)),
            pl.BlockSpec((1, ED), lambda i: (0, 0)),
        ],
        out_specs=pl.BlockSpec((B, ED), lambda i: (0, 0)),
        out_shape=jax.ShapeDtypeStruct((B, ED), jnp.float32),
        compiler_params=pltpu.CompilerParams(
            dimension_semantics=("arbitrary",)),
    )(x, adapt_input, packed["wg_t"], packed["bg"], packed["big_w"], packed["b_all"])

    out = slab[:, :D]                 # MoE output
    entropy = jnp.mean(slab[:, D])    # batch-mean of per-row gating entropy
    return out, entropy


def moe_reference(x, adapt_input, params):
    """Pure-JAX f32 reference mirroring the torch forward (per-sample adapt)."""
    logits = adapt_input @ params["wg"].T + params["bg"]
    p = jax.nn.softmax(logits, axis=-1)
    ent = -jnp.sum(p * jnp.log2(p + 1e-12), axis=-1)
    B, D = x.shape
    E = params["wg"].shape[0]
    out = jnp.zeros_like(x)
    for e in range(E):
        delta = (adapt_input @ params["wa"][e].T + params["ba"][e]).reshape(B, D, D)
        w = params["w"][e][None, :, :] + delta                      # (B, out, in)
        y = jnp.einsum("bi,boi->bo", x, w) + params["b"][e]
        out = out + p[:, e:e + 1] * y
    return out, ent.mean()


def init_params(key, expert_dim, num_experts, adapt_dim):
    D, E, A = expert_dim, num_experts, adapt_dim
    ks = jax.random.split(key, 6)
    return {
        "wg": 0.10 * jax.random.normal(ks[0], (E, A), jnp.float32),
        "bg": 0.10 * jax.random.normal(ks[1], (E,), jnp.float32),
        "w":  0.10 * jax.random.normal(ks[2], (E, D, D), jnp.float32),
        "b":  0.10 * jax.random.normal(ks[3], (E, D), jnp.float32),
        "wa": 0.02 * jax.random.normal(ks[4], (E, D * D, A), jnp.float32),
        "ba": 0.02 * jax.random.normal(ks[5], (E, D * D), jnp.float32),
    }


if __name__ == "__main__":
    B, D, A, E = 8, 32, 16, 4        # batch, expert_dim, adapt_dim, num_experts

    key = jax.random.PRNGKey(0)
    k_x, k_a, k_p = jax.random.split(key, 3)
    x = jax.random.normal(k_x, (B, D), jnp.float32)
    adapt_input = jax.random.normal(k_a, (B, A), jnp.float32)
    params = init_params(k_p, D, E, A)

    # One-time parameter packing (hoisted out of the per-call path).
    packed = jax.tree_util.tree_map(jax.block_until_ready, pack_moe_params(params))

    out, entropy = mixture_of_experts(x, adapt_input, packed)
    out = jax.block_until_ready(out)
    entropy = jax.block_until_ready(entropy)

    ref_out, ref_ent = moe_reference(x, adapt_input, params)
    # Expert matmul operands are bf16 (f32 accumulation), so compare against the
    # f32 reference at bf16-rounding tolerance; gating/entropy stay f32.
    assert jnp.allclose(out, ref_out, rtol=2e-2, atol=2e-2), "output mismatch"
    assert jnp.allclose(entropy, ref_ent, rtol=1e-3, atol=1e-3), "entropy mismatch"

    print("KERNEL_OK")
</pallas_src>

<mosaic_0001>
module attributes {stable_mosaic.version = 11 : i64} {
  func.func @moe_kernel(%arg0: i32, %arg1: memref<8x32xf32, #tpu.memory_space<vmem>>, %arg2: memref<8x16xf32, #tpu.memory_space<vmem>>, %arg3: memref<16x4xf32, #tpu.memory_space<vmem>>, %arg4: memref<1x4xf32, #tpu.memory_space<vmem>>, %arg5: memref<544x128xbf16, #tpu.memory_space<vmem>>, %arg6: memref<1x128xf32, #tpu.memory_space<vmem>>, %arg7: memref<8x128xf32, #tpu.memory_space<vmem>>) attributes {dimension_semantics = [#tpu.dimension_semantics<arbitrary>], iteration_bounds = array<i64: 1>, scalar_prefetch = 0 : i64, scratch_operands = 0 : i64, tpu.core_type = #tpu.core_type<tc>, window_params = [{pipeline_mode = #tpu.pipeline_mode<synchronous>, transform_indices = @transform_0, window_bounds = array<i64: 8, 32>}, {pipeline_mode = #tpu.pipeline_mode<synchronous>, transform_indices = @transform_1, window_bounds = array<i64: 8, 16>}, {pipeline_mode = #tpu.pipeline_mode<synchronous>, transform_indices = @transform_2, window_bounds = array<i64: 16, 4>}, {pipeline_mode = #tpu.pipeline_mode<synchronous>, transform_indices = @transform_3, window_bounds = array<i64: 1, 4>}, {pipeline_mode = #tpu.pipeline_mode<synchronous>, transform_indices = @transform_4, window_bounds = array<i64: 544, 128>}, {pipeline_mode = #tpu.pipeline_mode<synchronous>, transform_indices = @transform_5, window_bounds = array<i64: 1, 128>}, {pipeline_mode = #tpu.pipeline_mode<synchronous>, transform_indices = @transform_6, window_bounds = array<i64: 8, 128>}]} {
    %c0 = arith.constant 0 : index
    %c0_0 = arith.constant 0 : index
    %0 = vector.load %arg1[%c0, %c0_0] : memref<8x32xf32, #tpu.memory_space<vmem>>, vector<8x32xf32>
    %c0_1 = arith.constant 0 : index
    %c0_2 = arith.constant 0 : index
    %1 = vector.load %arg2[%c0_1, %c0_2] : memref<8x16xf32, #tpu.memory_space<vmem>>, vector<8x16xf32>
    %c0_3 = arith.constant 0 : index
    %c0_4 = arith.constant 0 : index
    %2 = vector.load %arg3[%c0_3, %c0_4] : memref<16x4xf32, #tpu.memory_space<vmem>>, vector<16x4xf32>
    %cst = arith.constant dense<0.000000e+00> : vector<8x4xf32>
    %3 = tpu.matmul %1, %2, %cst {dimension_numbers = #tpu.dot_dimension_numbers<[1], [0], [0], [1], [0, 0, 1, 1], [], []>, precision = #tpu.contract_precision<fp32>} : vector<8x16xf32>, vector<16x4xf32>, vector<8x4xf32> -> vector<8x4xf32>
    %c0_5 = arith.constant 0 : index
    %c0_6 = arith.constant 0 : index
    %4 = vector.load %arg4[%c0_5, %c0_6] : memref<1x4xf32, #tpu.memory_space<vmem>>, vector<1x4xf32>
    %5 = vector.broadcast %4 : vector<1x4xf32> to vector<8x4xf32>
    %6 = arith.addf %3, %5 : vector<8x4xf32>
    %cst_7 = arith.constant dense<0xFF800000> : vector<8xf32>
    %7 = vector.multi_reduction <maximumf>, %6, %cst_7 [1] : vector<8x4xf32> to vector<8xf32>
    %8 = vector.shape_cast %7 : vector<8xf32> to vector<8x1xf32>
    %9 = vector.broadcast %8 : vector<8x1xf32> to vector<8x4xf32>
    %10 = arith.subf %6, %9 : vector<8x4xf32>
    %11 = math.exp %10 : vector<8x4xf32>
    %cst_8 = arith.constant dense<0.000000e+00> : vector<8xf32>
    %12 = vector.multi_reduction <add>, %11, %cst_8 [1] : vector<8x4xf32> to vector<8xf32>
    %13 = vector.shape_cast %12 : vector<8xf32> to vector<8x1xf32>
    %14 = vector.broadcast %13 : vector<8x1xf32> to vector<8x4xf32>
    %15 = arith.divf %11, %14 : vector<8x4xf32>
    %cst_9 = arith.constant 9.99999996E-13 : f32
    %16 = vector.broadcast %cst_9 : f32 to vector<8x4xf32>
    %17 = arith.addf %15, %16 : vector<8x4xf32>
    %18 = math.log %17 : vector<8x4xf32>
    %cst_10 = arith.constant 2.000000e+00 : f32
    %19 = math.log %cst_10 : f32
    %20 = vector.broadcast %19 : f32 to vector<8x4xf32>
    %21 = arith.divf %18, %20 : vector<8x4xf32>
    %22 = arith.mulf %15, %21 : vector<8x4xf32>
    %cst_11 = arith.constant dense<0.000000e+00> : vector<8xf32>
    %23 = vector.multi_reduction <add>, %22, %cst_11 [1] : vector<8x4xf32> to vector<8xf32>
    %24 = vector.shape_cast %23 : vector<8xf32> to vector<8x1xf32>
    %cst_12 = arith.constant 0.000000e+00 : f32
    %25 = vector.broadcast %cst_12 : f32 to vector<8x1xf32>
    %26 = arith.subf %25, %24 : vector<8x1xf32>
    %27 = vector.extract_strided_slice %1 {offsets = [0, 0], sizes = [8, 1], strides = [1, 1]} : vector<8x16xf32> to vector<8x1xf32>
    %28 = vector.broadcast %27 : vector<8x1xf32> to vector<8x32xf32>
    %29 = arith.mulf %28, %0 : vector<8x32xf32>
    %30 = vector.extract_strided_slice %1 {offsets = [0, 1], sizes = [8, 1], strides = [1, 1]} : vector<8x16xf32> to vector<8x1xf32>
    %31 = vector.broadcast %30 : vector<8x1xf32> to vector<8x32xf32>
    %32 = arith.mulf %31, %0 : vector<8x32xf32>
    %33 = vector.extract_strided_slice %1 {offsets = [0, 2], sizes = [8, 1], strides = [1, 1]} : vector<8x16xf32> to vector<8x1xf32>
    %34 = vector.broadcast %33 : vector<8x1xf32> to vector<8x32xf32>
    %35 = arith.mulf %34, %0 : vector<8x32xf32>
    %36 = vector.extract_strided_slice %1 {offsets = [0, 3], sizes = [8, 1], strides = [1, 1]} : vector<8x16xf32> to vector<8x1xf32>
    %37 = vector.broadcast %36 : vector<8x1xf32> to vector<8x32xf32>
    %38 = arith.mulf %37, %0 : vector<8x32xf32>
    %39 = vector.extract_strided_slice %1 {offsets = [0, 4], sizes = [8, 1], strides = [1, 1]} : vector<8x16xf32> to vector<8x1xf32>
    %40 = vector.broadcast %39 : vector<8x1xf32> to vector<8x32xf32>
    %41 = arith.mulf %40, %0 : vector<8x32xf32>
    %42 = vector.extract_strided_slice %1 {offsets = [0, 5], sizes = [8, 1], strides = [1, 1]} : vector<8x16xf32> to vector<8x1xf32>
    %43 = vector.broadcast %42 : vector<8x1xf32> to vector<8x32xf32>
    %44 = arith.mulf %43, %0 : vector<8x32xf32>
    %45 = vector.extract_strided_slice %1 {offsets = [0, 6], sizes = [8, 1], strides = [1, 1]} : vector<8x16xf32> to vector<8x1xf32>
    %46 = vector.broadcast %45 : vector<8x1xf32> to vector<8x32xf32>
    %47 = arith.mulf %46, %0 : vector<8x32xf32>
    %48 = vector.extract_strided_slice %1 {offsets = [0, 7], sizes = [8, 1], strides = [1, 1]} : vector<8x16xf32> to vector<8x1xf32>
    %49 = vector.broadcast %48 : vector<8x1xf32> to vector<8x32xf32>
    %50 = arith.mulf %49, %0 : vector<8x32xf32>
    %51 = vector.extract_strided_slice %1 {offsets = [0, 8], sizes = [8, 1], strides = [1, 1]} : vector<8x16xf32> to vector<8x1xf32>
    %52 = vector.broadcast %51 : vector<8x1xf32> to vector<8x32xf32>
    %53 = arith.mulf %52, %0 : vector<8x32xf32>
    %54 = vector.extract_strided_slice %1 {offsets = [0, 9], sizes = [8, 1], strides = [1, 1]} : vector<8x16xf32> to vector<8x1xf32>
    %55 = vector.broadcast %54 : vector<8x1xf32> to vector<8x32xf32>
    %56 = arith.mulf %55, %0 : vector<8x32xf32>
    %57 = vector.extract_strided_slice %1 {offsets = [0, 10], sizes = [8, 1], strides = [1, 1]} : vector<8x16xf32> to vector<8x1xf32>
    %58 = vector.broadcast %57 : vector<8x1xf32> to vector<8x32xf32>
    %59 = arith.mulf %58, %0 : vector<8x32xf32>
    %60 = vector.extract_strided_slice %1 {offsets = [0, 11], sizes = [8, 1], strides = [1, 1]} : vector<8x16xf32> to vector<8x1xf32>
    %61 = vector.broadcast %60 : vector<8x1xf32> to vector<8x32xf32>
    %62 = arith.mulf %61, %0 : vector<8x32xf32>
    %63 = vector.extract_strided_slice %1 {offsets = [0, 12], sizes = [8, 1], strides = [1, 1]} : vector<8x16xf32> to vector<8x1xf32>
    %64 = vector.broadcast %63 : vector<8x1xf32> to vector<8x32xf32>
    %65 = arith.mulf %64, %0 : vector<8x32xf32>
    %66 = vector.extract_strided_slice %1 {offsets = [0, 13], sizes = [8, 1], strides = [1, 1]} : vector<8x16xf32> to vector<8x1xf32>
    %67 = vector.broadcast %66 : vector<8x1xf32> to vector<8x32xf32>
    %68 = arith.mulf %67, %0 : vector<8x32xf32>
    %69 = vector.extract_strided_slice %1 {offsets = [0, 14], sizes = [8, 1], strides = [1, 1]} : vector<8x16xf32> to vector<8x1xf32>
    %70 = vector.broadcast %69 : vector<8x1xf32> to vector<8x32xf32>
    %71 = arith.mulf %70, %0 : vector<8x32xf32>
    %72 = vector.extract_strided_slice %1 {offsets = [0, 15], sizes = [8, 1], strides = [1, 1]} : vector<8x16xf32> to vector<8x1xf32>
    %73 = vector.broadcast %72 : vector<8x1xf32> to vector<8x32xf32>
    %74 = arith.mulf %73, %0 : vector<8x32xf32>
    %75 = tpu.concatenate %0, %29, %32, %35, %38, %41, %44, %47, %50, %53, %56, %59, %62, %65, %68, %71 in 1 : vector<8x32xf32>, vector<8x32xf32>, vector<8x32xf32>, vector<8x32xf32>, vector<8x32xf32>, vector<8x32xf32>, vector<8x32xf32>, vector<8x32xf32>, vector<8x32xf32>, vector<8x32xf32>, vector<8x32xf32>, vector<8x32xf32>, vector<8x32xf32>, vector<8x32xf32>, vector<8x32xf32>, vector<8x32xf32> -> vector<8x512xf32>
    %76 = tpu.concatenate %75, %74 in 1 : vector<8x512xf32>, vector<8x32xf32> -> vector<8x544xf32>
    %77 = arith.truncf %76 : vector<8x544xf32> to vector<8x544xbf16>
    %c0_13 = arith.constant 0 : index
    %c0_14 = arith.constant 0 : index
    %78 = vector.load %arg5[%c0_13, %c0_14] : memref<544x128xbf16, #tpu.memory_space<vmem>>, vector<544x128xbf16>
    %cst_15 = arith.constant dense<0.000000e+00> : vector<8x128xf32>
    %79 = tpu.matmul %77, %78, %cst_15 {dimension_numbers = #tpu.dot_dimension_numbers<[1], [0], [0], [1], [0, 0, 1, 1], [], []>} : vector<8x544xbf16>, vector<544x128xbf16>, vector<8x128xf32> -> vector<8x128xf32>
    %c0_16 = arith.constant 0 : index
    %c0_17 = arith.constant 0 : index
    %80 = vector.load %arg6[%c0_16, %c0_17] : memref<1x128xf32, #tpu.memory_space<vmem>>, vector<1x128xf32>
    %81 = vector.broadcast %80 : vector<1x128xf32> to vector<8x128xf32>
    %82 = arith.addf %79, %81 : vector<8x128xf32>
    %83 = vector.extract_strided_slice %15 {offsets = [0, 0], sizes = [8, 1], strides = [1, 1]} : vector<8x4xf32> to vector<8x1xf32>
    %84 = vector.shape_cast %83 : vector<8x1xf32> to vector<8x1xf32>
    %85 = vector.broadcast %84 : vector<8x1xf32> to vector<8x32xf32>
    %86 = vector.extract_strided_slice %15 {offsets = [0, 1], sizes = [8, 1], strides = [1, 1]} : vector<8x4xf32> to vector<8x1xf32>
    %87 = vector.shape_cast %86 : vector<8x1xf32> to vector<8x1xf32>
    %88 = vector.broadcast %87 : vector<8x1xf32> to vector<8x32xf32>
    %89 = vector.extract_strided_slice %15 {offsets = [0, 2], sizes = [8, 1], strides = [1, 1]} : vector<8x4xf32> to vector<8x1xf32>
    %90 = vector.shape_cast %89 : vector<8x1xf32> to vector<8x1xf32>
    %91 = vector.broadcast %90 : vector<8x1xf32> to vector<8x32xf32>
    %92 = vector.extract_strided_slice %15 {offsets = [0, 3], sizes = [8, 1], strides = [1, 1]} : vector<8x4xf32> to vector<8x1xf32>
    %93 = vector.shape_cast %92 : vector<8x1xf32> to vector<8x1xf32>
    %94 = vector.broadcast %93 : vector<8x1xf32> to vector<8x32xf32>
    %95 = tpu.concatenate %85, %88, %91, %94 in 1 : vector<8x32xf32>, vector<8x32xf32>, vector<8x32xf32>, vector<8x32xf32> -> vector<8x128xf32>
    %96 = arith.mulf %95, %82 : vector<8x128xf32>
    %c64_i32 = arith.constant 64 : i32
    %97 = tpu.dynamic_rotate %96 by %c64_i32 dim 1 : vector<8x128xf32>, i32 -> vector<8x128xf32>
    %98 = arith.addf %96, %97 : vector<8x128xf32>
    %c96_i32 = arith.constant 96 : i32
    %99 = tpu.dynamic_rotate %98 by %c96_i32 dim 1 : vector<8x128xf32>, i32 -> vector<8x128xf32>
    %100 = arith.addf %98, %99 : vector<8x128xf32>
    %101 = vector.extract_strided_slice %100 {offsets = [0, 0], sizes = [8, 32], strides = [1, 1]} : vector<8x128xf32> to vector<8x32xf32>
    %102 = vector.shape_cast %26 : vector<8x1xf32> to vector<8x1xf32>
    %103 = vector.broadcast %102 : vector<8x1xf32> to vector<8x96xf32>
    %104 = tpu.concatenate %101, %103 in 1 : vector<8x32xf32>, vector<8x96xf32> -> vector<8x128xf32>
    %c0_18 = arith.constant 0 : index
    %c0_19 = arith.constant 0 : index
    %105 = vector.load %arg7[%c0_18, %c0_19] : memref<8x128xf32, #tpu.memory_space<vmem>>, vector<8x128xf32>
    tpu.vector_store %arg7[%c0_18, %c0_19], %104 {strides = array<i32>} : memref<8x128xf32, #tpu.memory_space<vmem>>, vector<8x128xf32>,
    return
  }
  func.func @transform_0(%arg0: i32) -> (i32, i32) {
    %c0_i32 = arith.constant 0 : i32
    %c0_i32_0 = arith.constant 0 : i32
    %c0_i32_1 = arith.constant 0 : i32
    return %c0_i32, %c0_i32_0 : i32, i32
  }
  func.func @transform_1(%arg0: i32) -> (i32, i32) {
    %c0_i32 = arith.constant 0 : i32
    %c0_i32_0 = arith.constant 0 : i32
    %c0_i32_1 = arith.constant 0 : i32
    return %c0_i32, %c0_i32_0 : i32, i32
  }
  func.func @transform_2(%arg0: i32) -> (i32, i32) {
    %c0_i32 = arith.constant 0 : i32
    %c0_i32_0 = arith.constant 0 : i32
    %c0_i32_1 = arith.constant 0 : i32
    return %c0_i32, %c0_i32_0 : i32, i32
  }
  func.func @transform_3(%arg0: i32) -> (i32, i32) {
    %c0_i32 = arith.constant 0 : i32
    %c0_i32_0 = arith.constant 0 : i32
    %c0_i32_1 = arith.constant 0 : i32
    return %c0_i32, %c0_i32_0 : i32, i32
  }
  func.func @transform_4(%arg0: i32) -> (i32, i32) {
    %c0_i32 = arith.constant 0 : i32
    %c0_i32_0 = arith.constant 0 : i32
    %c0_i32_1 = arith.constant 0 : i32
    return %c0_i32, %c0_i32_0 : i32, i32
  }
  func.func @transform_5(%arg0: i32) -> (i32, i32) {
    %c0_i32 = arith.constant 0 : i32
    %c0_i32_0 = arith.constant 0 : i32
    %c0_i32_1 = arith.constant 0 : i32
    return %c0_i32, %c0_i32_0 : i32, i32
  }
  func.func @transform_6(%arg0: i32) -> (i32, i32) {
    %c0_i32 = arith.constant 0 : i32
    %c0_i32_0 = arith.constant 0 : i32
    %c0_i32_1 = arith.constant 0 : i32
    return %c0_i32, %c0_i32_0 : i32, i32
  }
}

</mosaic_0001>

<llo_original>
// kernel: mixture_of_experts.1
$region0: #{mixture_of_experts.1}
  #allocation0 [shape = 'u32[]', space=smem, size = 0x4, offset = 0x4, fixed_abs, tag = 'smem constant byte address 0x4 - core index']
  #allocation1 [shape = 'u32[144,128]{1,0:T(1,128)}', space=vmem, size = 0x12000, scoped, tag = 'internal scratch']
  %s0 = inlined_call_operand.vmem [shape: f32[8,32], index: 0, kind: input, shape index: {}]
  %s1 = inlined_call_operand.vmem [shape: f32[8,16], index: 1, kind: input, shape index: {}]
  %s2 = inlined_call_operand.vmem [shape: f32[16,4], index: 2, kind: input, shape index: {}]
  %s3 = inlined_call_operand.vmem [shape: f32[1,4], index: 3, kind: input, shape index: {}]
  %s4 = inlined_call_operand.hbm [shape: bf16[544,128], index: 4, kind: input, shape index: {}]
  %s5 = inlined_call_operand.vmem [shape: f32[1,128], index: 5, kind: input, shape index: {}]
  %s6 = inlined_call_operand.vmem [shape: f32[8,128], index: 6, kind: output, shape index: {}]
  %s7 = sld [smem:[#allocation0]]
  $region38: #{mixture_of_experts.1} parent=0
    _
  %s9 = ssub.s32 1, %s7
  %s10 = scalar_select 0, %s9, %s7
  $region1: #{mixture_of_experts.1} parent=0
    #allocation2 [shape = 'u8[139264]{0}', space=vmem, size = 0x22000, scoped, tag = 'input window, operand 4, single buffered']
    #allocation3 [shape = 's32[1]{0}', space=sflag, size = 0x4, scoped, tag = 'scoped memory for mixture_of_experts.1']
    %11 = vsyncpa [#allocation3], 0
    // Predicated region
    $region2: #{mixture_of_experts.1} parent=1 // pred_check
      _
    $region3: #{mixture_of_experts.1} parent=1 // pred_check_branch
      %13 = sbr.rel (0) target = $region5
    $region4: #{mixture_of_experts.1} parent=1 // pred_region
      _
    $region5: #{mixture_of_experts.1} parent=1 // pred_fallthru
      _
    // Predicated region
    $region6: #{mixture_of_experts.1} parent=1 // pred_check
      _
    $region7: #{mixture_of_experts.1} parent=1 // pred_check_branch
      %15 = sbr.rel (0) target = $region9
    $region8: #{mixture_of_experts.1} parent=1 // pred_region
      _
    $region9: #{mixture_of_experts.1} parent=1 // pred_fallthru
      _
    // Predicated region
    $region10: #{mixture_of_experts.1} parent=1 // pred_check
      _
    $region11: #{mixture_of_experts.1} parent=1 // pred_check_branch
      %17 = sbr.rel (0) target = $region13
    $region12: #{mixture_of_experts.1} parent=1 // pred_region
      _
    $region13: #{mixture_of_experts.1} parent=1 // pred_fallthru
      _
    // Predicated region
    $region14: #{mixture_of_experts.1} parent=1 // pred_check
      _
    $region15: #{mixture_of_experts.1} parent=1 // pred_check_branch
      %19 = sbr.rel (0) target = $region17
    $region16: #{mixture_of_experts.1} parent=1 // pred_region
      _
    $region17: #{mixture_of_experts.1} parent=1 // pred_fallthru
      _
    // Predicated region
    $region18: #{mixture_of_experts.1} parent=1 // pred_check
      _
    $region19: #{mixture_of_experts.1} parent=1 // pred_check_branch
      %21 = sbr.rel (0) target = $region21
    $region20: #{mixture_of_experts.1} parent=1 // pred_region
      %s23 = ssub.s32 4352, 4352
      %24 = vsyncadd [#allocation3], %s23
      %s25 = sshll.u32 [#allocation2], 4
      %s26 = int_to_ptr.vmem [resolvable:$true] %s25
      %31 = dma.hbm_to_vmem [thread:$0]  %s4, 4352, %s26, [#allocation3], 64, 64, 4
    $region21: #{mixture_of_experts.1} parent=1 // pred_fallthru
      _
    // Predicated region
    $region22: #{mixture_of_experts.1} parent=1 // pred_check
      _
    $region23: #{mixture_of_experts.1} parent=1 // pred_check_branch
      %33 = sbr.rel (0) target = $region25
    $region24: #{mixture_of_experts.1} parent=1 // pred_region
      _
    $region25: #{mixture_of_experts.1} parent=1 // pred_fallthru
      _
    // Predicated region
    $region26: #{mixture_of_experts.1} parent=1 // pred_check
      _
    $region27: #{mixture_of_experts.1} parent=1 // pred_check_branch
      %35 = sbr.rel (0) target = $region29
    $region28: #{mixture_of_experts.1} parent=1 // pred_region
      %36 = dma.done [#allocation3], 4352
    $region29: #{mixture_of_experts.1} parent=1 // pred_fallthru
      _
    %v38 = vld [vmem:[%s0] sm:$0xff]
    %v39 = vld [vmem:[%s1] sm:$0xff]
    %v40 = vld [vmem:[%s2] sm:$0xff]
    %v41 = vld [vmem:[%s2 + $0x8] sm:$0xff]
    %v42 = vld [vmem:[%s3] sm:$0x1]
    %v44 = vlaneseq
    %v45 = vshrl.u32 %v44, 7
    %v46 = vsub.s32 0, %v45
    %v47 = vrot.slane %v42, %v46
    %vm49 = vcmask 130048
    %v51 = vsel %vm49, %v39, 0
    %53 = vmatprep.subr.mxu0 0.0
    %54 = vmatpush1.msra.mxu0 0.0
    %55 = vmatprep.subr.mxu0 0.0
    %56 = vmatpush1.msra.mxu0 0.0
    %57 = vmatprep.subr.mxu0 0.0
    %58 = vmatpush1.msra.mxu0 0.0
    %59 = vmatprep.subr.mxu0 0.0
    %60 = vmatpush1.msra.mxu0 0.0
    %61 = vmatprep.subr.mxu0 0.0
    %62 = vmatpush1.msra.mxu0 0.0
    %63 = vmatprep.subr.mxu0 0.0
    %64 = vmatpush1.msra.mxu0 0.0
    %65 = vmatprep.subr.mxu0 0.0
    %66 = vmatpush1.msra.mxu0 0.0
    %67 = vmatprep.subr.mxu0 0.0
    %68 = vmatpush1.msra.mxu0 0.0
    %69 = vmatprep.subr.mxu0 0.0
    %70 = vmatpush1.msra.mxu0 0.0
    %71 = vmatprep.subr.mxu0 0.0
    %72 = vmatpush1.msra.mxu0 0.0
    %73 = vmatprep.subr.mxu0 0.0
    %74 = vmatpush1.msra.mxu0 0.0
    %75 = vmatprep.subr.mxu0 0.0
    %76 = vmatpush1.msra.mxu0 0.0
    %77 = vmatprep.subr.mxu0 0.0
    %78 = vmatpush1.msra.mxu0 0.0
    %79 = vmatprep.subr.mxu0 0.0
    %80 = vmatpush1.msra.mxu0 0.0
    %81 = vmatprep.subr.mxu0 0.0
    %v82 = vand.u32 %v41, 4294901760
    %83 = vmatpush1.msra.mxu0 %v82
    %84 = vmatprep.subr.mxu0 0.0
    %v85 = vand.u32 %v40, 4294901760
    %86 = vmatpush1.msra.mxu0 %v85
    %87 = vmatprep.subr.mxu0 0.0
    %88 = vmatpush2.msra.mxu0 0.0
    %89 = vmatprep.subr.mxu0 0.0
    %90 = vmatpush2.msra.mxu0 0.0
    %91 = vmatprep.subr.mxu0 0.0
    %92 = vmatpush2.msra.mxu0 0.0
    %93 = vmatprep.subr.mxu0 0.0
    %94 = vmatpush2.msra.mxu0 0.0
    %95 = vmatprep.subr.mxu0 0.0
    %96 = vmatpush2.msra.mxu0 0.0
    %97 = vmatprep.subr.mxu0 0.0
    %98 = vmatpush2.msra.mxu0 0.0
    %99 = vmatprep.subr.mxu0 0.0
    %100 = vmatpush2.msra.mxu0 0.0
    %101 = vmatprep.subr.mxu0 0.0
    %102 = vmatpush2.msra.mxu0 0.0
    %103 = vmatprep.subr.mxu0 0.0
    %104 = vmatpush2.msra.mxu0 0.0
    %105 = vmatprep.subr.mxu0 0.0
    %106 = vmatpush2.msra.mxu0 0.0
    %107 = vmatprep.subr.mxu0 0.0
    %108 = vmatpush2.msra.mxu0 0.0
    %109 = vmatprep.subr.mxu0 0.0
    %110 = vmatpush2.msra.mxu0 0.0
    %111 = vmatprep.subr.mxu0 0.0
    %112 = vmatpush2.msra.mxu0 0.0
    %113 = vmatprep.subr.mxu0 0.0
    %114 = vmatpush2.msra.mxu0 0.0
    %115 = vmatprep.subr.mxu0 0.0
    %116 = vmatpush2.msra.mxu0 0.0
    %117 = vmatprep.subr.mxu0 0.0
    %118 = vmatpush2.msra.mxu0 0.0
    %119 = vmatprep.mubr.f32.mxu0 0.0
    %v120 = vand.u32 %v51, 4294901760
    %v121 = vsub.f32 %v51, %v120
    %v122 = vand.u32 %v121, 4294901760
    %v123 = vsub.f32 %v121, %v122
    %v124 = vand.u32 %v123, 4294901760
    %125 = vmatmul.mubr.f32.gmra.mxu0 %v124
    %v126 = vpop.f32.mrf.mxu0
    %v127 = vadd.f32 %v47, %v126
    %v128 = vpop.f32.mrf.mxu0
    %129 = vdwg.mxu0
    %130 = vmatprep.subr.mxu0 0.0
    %131 = vmatpush1.msra.mxu0 0.0
    %132 = vmatprep.subr.mxu0 0.0
    %133 = vmatpush1.msra.mxu0 0.0
    %134 = vmatprep.subr.mxu0 0.0
    %135 = vmatpush1.msra.mxu0 0.0
    %136 = vmatprep.subr.mxu0 0.0
    %137 = vmatpush1.msra.mxu0 0.0
    %138 = vmatprep.subr.mxu0 0.0
    %139 = vmatpush1.msra.mxu0 0.0
    %140 = vmatprep.subr.mxu0 0.0
    %141 = vmatpush1.msra.mxu0 0.0
    %142 = vmatprep.subr.mxu0 0.0
    %143 = vmatpush1.msra.mxu0 0.0
    %144 = vmatprep.subr.mxu0 0.0
    %145 = vmatpush1.msra.mxu0 0.0
    %146 = vmatprep.subr.mxu0 0.0
    %147 = vmatpush1.msra.mxu0 0.0
    %148 = vmatprep.subr.mxu0 0.0
    %149 = vmatpush1.msra.mxu0 0.0
    %150 = vmatprep.subr.mxu0 0.0
    %151 = vmatpush1.msra.mxu0 0.0
    %152 = vmatprep.subr.mxu0 0.0
    %153 = vmatpush1.msra.mxu0 0.0
    %154 = vmatprep.subr.mxu0 0.0
    %155 = vmatpush1.msra.mxu0 0.0
    %156 = vmatprep.subr.mxu0 0.0
    %157 = vmatpush1.msra.mxu0 0.0
    %158 = vmatprep.subr.mxu0 0.0
    %v159 = vand.u32 %v41, 4294901760
    %v160 = vsub.f32 %v41, %v159
    %v161 = vand.u32 %v160, 4294901760
    %v162 = vsub.f32 %v160, %v161
    %v163 = vand.u32 %v162, 4294901760
    %164 = vmatpush1.msra.mxu0 %v163
    %165 = vmatprep.subr.mxu0 0.0
    %v166 = vand.u32 %v40, 4294901760
    %v167 = vsub.f32 %v40, %v166
    %v168 = vand.u32 %v167, 4294901760
    %v169 = vsub.f32 %v167, %v168
    %v170 = vand.u32 %v169, 4294901760
    %171 = vmatpush1.msra.mxu0 %v170
    %172 = vmatprep.subr.mxu0 0.0
    %173 = vmatpush2.msra.mxu0 0.0
    %174 = vmatprep.subr.mxu0 0.0
    %175 = vmatpush2.msra.mxu0 0.0
    %176 = vmatprep.subr.mxu0 0.0
    %177 = vmatpush2.msra.mxu0 0.0
    %178 = vmatprep.subr.mxu0 0.0
    %179 = vmatpush2.msra.mxu0 0.0
    %180 = vmatprep.subr.mxu0 0.0
    %181 = vmatpush2.msra.mxu0 0.0
    %182 = vmatprep.subr.mxu0 0.0
    %183 = vmatpush2.msra.mxu0 0.0
    %184 = vmatprep.subr.mxu0 0.0
    %185 = vmatpush2.msra.mxu0 0.0
    %186 = vmatprep.subr.mxu0 0.0
    %187 = vmatpush2.msra.mxu0 0.0
    %188 = vmatprep.subr.mxu0 0.0
    %189 = vmatpush2.msra.mxu0 0.0
    %190 = vmatprep.subr.mxu0 0.0
    %191 = vmatpush2.msra.mxu0 0.0
    %192 = vmatprep.subr.mxu0 0.0
    %193 = vmatpush2.msra.mxu0 0.0
    %194 = vmatprep.subr.mxu0 0.0
    %195 = vmatpush2.msra.mxu0 0.0
    %196 = vmatprep.subr.mxu0 0.0
    %197 = vmatpush2.msra.mxu0 0.0
    %198 = vmatprep.subr.mxu0 0.0
    %199 = vmatpush2.msra.mxu0 0.0
    %200 = vmatprep.subr.mxu0 0.0
    %201 = vmatpush2.msra.mxu0 0.0
    %202 = vmatprep.subr.mxu0 0.0
    %203 = vmatpush2.msra.mxu0 0.0
    %204 = vmatprep.mubr.f32.mxu0 0.0
    %v205 = vand.u32 %v51, 4294901760
    %206 = vmatmul.mubr.f32.gmra.mxu0 %v205
    %v207 = vpop.f32.mrf.mxu0
    %v208 = vadd.f32 %v127, %v207
    %v209 = vpop.f32.mrf.mxu0
    %210 = vdwg.mxu0
    %211 = vmatprep.subr.mxu0 0.0
    %212 = vmatpush1.msra.mxu0 0.0
    %213 = vmatprep.subr.mxu0 0.0
    %214 = vmatpush1.msra.mxu0 0.0
    %215 = vmatprep.subr.mxu0 0.0
    %216 = vmatpush1.msra.mxu0 0.0
    %217 = vmatprep.subr.mxu0 0.0
    %218 = vmatpush1.msra.mxu0 0.0
    %219 = vmatprep.subr.mxu0 0.0
    %220 = vmatpush1.msra.mxu0 0.0
    %221 = vmatprep.subr.mxu0 0.0
    %222 = vmatpush1.msra.mxu0 0.0
    %223 = vmatprep.subr.mxu0 0.0
    %224 = vmatpush1.msra.mxu0 0.0
    %225 = vmatprep.subr.mxu0 0.0
    %226 = vmatpush1.msra.mxu0 0.0
    %227 = vmatprep.subr.mxu0 0.0
    %228 = vmatpush1.msra.mxu0 0.0
    %229 = vmatprep.subr.mxu0 0.0
    %230 = vmatpush1.msra.mxu0 0.0
    %231 = vmatprep.subr.mxu0 0.0
    %232 = vmatpush1.msra.mxu0 0.0
    %233 = vmatprep.subr.mxu0 0.0
    %234 = vmatpush1.msra.mxu0 0.0
    %235 = vmatprep.subr.mxu0 0.0
    %236 = vmatpush1.msra.mxu0 0.0
    %237 = vmatprep.subr.mxu0 0.0
    %238 = vmatpush1.msra.mxu0 0.0
    %239 = vmatprep.subr.mxu0 0.0
    %v240 = vand.u32 %v41, 4294901760
    %v241 = vsub.f32 %v41, %v240
    %242 = vmatpush1.msra.mxu0 %v241
    %243 = vmatprep.subr.mxu0 0.0
    %v244 = vand.u32 %v40, 4294901760
    %v245 = vsub.f32 %v40, %v244
    %246 = vmatpush1.msra.mxu0 %v245
    %247 = vmatprep.subr.mxu0 0.0
    %248 = vmatpush2.msra.mxu0 0.0
    %249 = vmatprep.subr.mxu0 0.0
    %250 = vmatpush2.msra.mxu0 0.0
    %251 = vmatprep.subr.mxu0 0.0
    %252 = vmatpush2.msra.mxu0 0.0
    %253 = vmatprep.subr.mxu0 0.0
    %254 = vmatpush2.msra.mxu0 0.0
    %255 = vmatprep.subr.mxu0 0.0
    %256 = vmatpush2.msra.mxu0 0.0
    %257 = vmatprep.subr.mxu0 0.0
    %258 = vmatpush2.msra.mxu0 0.0
    %259 = vmatprep.subr.mxu0 0.0
    %260 = vmatpush2.msra.mxu0 0.0
    %261 = vmatprep.subr.mxu0 0.0
    %262 = vmatpush2.msra.mxu0 0.0
    %263 = vmatprep.subr.mxu0 0.0
    %264 = vmatpush2.msra.mxu0 0.0
    %265 = vmatprep.subr.mxu0 0.0
    %266 = vmatpush2.msra.mxu0 0.0
    %267 = vmatprep.subr.mxu0 0.0
    %268 = vmatpush2.msra.mxu0 0.0
    %269 = vmatprep.subr.mxu0 0.0
    %270 = vmatpush2.msra.mxu0 0.0
    %271 = vmatprep.subr.mxu0 0.0
    %272 = vmatpush2.msra.mxu0 0.0
    %273 = vmatprep.subr.mxu0 0.0
    %274 = vmatpush2.msra.mxu0 0.0
    %275 = vmatprep.subr.mxu0 0.0
    %276 = vmatpush2.msra.mxu0 0.0
    %277 = vmatprep.subr.mxu0 0.0
    %278 = vmatpush2.msra.mxu0 0.0
    %279 = vmatprep.mubr.f32.mxu0 0.0
    %v280 = vand.u32 %v51, 4294901760
    %v281 = vsub.f32 %v51, %v280
    %282 = vmatmul.mubr.f32.gmra.mxu0 %v281
    %v283 = vpop.f32.mrf.mxu0
    %v284 = vadd.f32 %v208, %v283
    %v285 = vpop.f32.mrf.mxu0
    %286 = vdwg.mxu0
    %287 = vmatprep.subr.mxu0 0.0
    %288 = vmatpush1.msra.mxu0 0.0
    %289 = vmatprep.subr.mxu0 0.0
    %290 = vmatpush1.msra.mxu0 0.0
    %291 = vmatprep.subr.mxu0 0.0
    %292 = vmatpush1.msra.mxu0 0.0
    %293 = vmatprep.subr.mxu0 0.0
    %294 = vmatpush1.msra.mxu0 0.0
    %295 = vmatprep.subr.mxu0 0.0
    %296 = vmatpush1.msra.mxu0 0.0
    %297 = vmatprep.subr.mxu0 0.0
    %298 = vmatpush1.msra.mxu0 0.0
    %299 = vmatprep.subr.mxu0 0.0
    %300 = vmatpush1.msra.mxu0 0.0
    %301 = vmatprep.subr.mxu0 0.0
    %302 = vmatpush1.msra.mxu0 0.0
    %303 = vmatprep.subr.mxu0 0.0
    %304 = vmatpush1.msra.mxu0 0.0
    %305 = vmatprep.subr.mxu0 0.0
    %306 = vmatpush1.msra.mxu0 0.0
    %307 = vmatprep.subr.mxu0 0.0
    %308 = vmatpush1.msra.mxu0 0.0
    %309 = vmatprep.subr.mxu0 0.0
    %310 = vmatpush1.msra.mxu0 0.0
    %311 = vmatprep.subr.mxu0 0.0
    %312 = vmatpush1.msra.mxu0 0.0
    %313 = vmatprep.subr.mxu0 0.0
    %314 = vmatpush1.msra.mxu0 0.0
    %315 = vmatprep.subr.mxu0 0.0
    %v316 = vand.u32 %v41, 4294901760
    %317 = vmatpush1.msra.mxu0 %v316
    %318 = vmatprep.subr.mxu0 0.0
    %v319 = vand.u32 %v40, 4294901760
    %320 = vmatpush1.msra.mxu0 %v319
    %321 = vmatprep.subr.mxu0 0.0
    %322 = vmatpush2.msra.mxu0 0.0
    %323 = vmatprep.subr.mxu0 0.0
    %324 = vmatpush2.msra.mxu0 0.0
    %325 = vmatprep.subr.mxu0 0.0
    %326 = vmatpush2.msra.mxu0 0.0
    %327 = vmatprep.subr.mxu0 0.0
    %328 = vmatpush2.msra.mxu0 0.0
    %329 = vmatprep.subr.mxu0 0.0
    %330 = vmatpush2.msra.mxu0 0.0
    %331 = vmatprep.subr.mxu0 0.0
    %332 = vmatpush2.msra.mxu0 0.0
    %333 = vmatprep.subr.mxu0 0.0
    %334 = vmatpush2.msra.mxu0 0.0
    %335 = vmatprep.subr.mxu0 0.0
    %336 = vmatpush2.msra.mxu0 0.0
    %337 = vmatprep.subr.mxu0 0.0
    %338 = vmatpush2.msra.mxu0 0.0
    %339 = vmatprep.subr.mxu0 0.0
    %340 = vmatpush2.msra.mxu0 0.0
    %341 = vmatprep.subr.mxu0 0.0
    %342 = vmatpush2.msra.mxu0 0.0
    %343 = vmatprep.subr.mxu0 0.0
    %344 = vmatpush2.msra.mxu0 0.0
    %345 = vmatprep.subr.mxu0 0.0
    %346 = vmatpush2.msra.mxu0 0.0
    %347 = vmatprep.subr.mxu0 0.0
    %348 = vmatpush2.msra.mxu0 0.0
    %349 = vmatprep.subr.mxu0 0.0
    %350 = vmatpush2.msra.mxu0 0.0
    %351 = vmatprep.subr.mxu0 0.0
    %352 = vmatpush2.msra.mxu0 0.0
    %353 = vmatprep.mubr.f32.mxu0 0.0
    %v354 = vand.u32 %v51, 4294901760
    %v355 = vsub.f32 %v51, %v354
    %v356 = vand.u32 %v355, 4294901760
    %357 = vmatmul.mubr.f32.gmra.mxu0 %v356
    %v358 = vpop.f32.mrf.mxu0
    %v359 = vadd.f32 %v284, %v358
    %v360 = vpop.f32.mrf.mxu0
    %361 = vdwg.mxu0
    %362 = vmatprep.subr.mxu0 0.0
    %363 = vmatpush1.msra.mxu0 0.0
    %364 = vmatprep.subr.mxu0 0.0
    %365 = vmatpush1.msra.mxu0 0.0
    %366 = vmatprep.subr.mxu0 0.0
    %367 = vmatpush1.msra.mxu0 0.0
    %368 = vmatprep.subr.mxu0 0.0
    %369 = vmatpush1.msra.mxu0 0.0
    %370 = vmatprep.subr.mxu0 0.0
    %371 = vmatpush1.msra.mxu0 0.0
    %372 = vmatprep.subr.mxu0 0.0
    %373 = vmatpush1.msra.mxu0 0.0
    %374 = vmatprep.subr.mxu0 0.0
    %375 = vmatpush1.msra.mxu0 0.0
    %376 = vmatprep.subr.mxu0 0.0
    %377 = vmatpush1.msra.mxu0 0.0
    %378 = vmatprep.subr.mxu0 0.0
    %379 = vmatpush1.msra.mxu0 0.0
    %380 = vmatprep.subr.mxu0 0.0
    %381 = vmatpush1.msra.mxu0 0.0
    %382 = vmatprep.subr.mxu0 0.0
    %383 = vmatpush1.msra.mxu0 0.0
    %384 = vmatprep.subr.mxu0 0.0
    %385 = vmatpush1.msra.mxu0 0.0
    %386 = vmatprep.subr.mxu0 0.0
    %387 = vmatpush1.msra.mxu0 0.0
    %388 = vmatprep.subr.mxu0 0.0
    %389 = vmatpush1.msra.mxu0 0.0
    %390 = vmatprep.subr.mxu0 0.0
    %v391 = vand.u32 %v41, 4294901760
    %v392 = vsub.f32 %v41, %v391
    %v393 = vand.u32 %v392, 4294901760
    %394 = vmatpush1.msra.mxu0 %v393
    %395 = vmatprep.subr.mxu0 0.0
    %v396 = vand.u32 %v40, 4294901760
    %v397 = vsub.f32 %v40, %v396
    %v398 = vand.u32 %v397, 4294901760
    %399 = vmatpush1.msra.mxu0 %v398
    %400 = vmatprep.subr.mxu0 0.0
    %401 = vmatpush2.msra.mxu0 0.0
    %402 = vmatprep.subr.mxu0 0.0
    %403 = vmatpush2.msra.mxu0 0.0
    %404 = vmatprep.subr.mxu0 0.0
    %405 = vmatpush2.msra.mxu0 0.0
    %406 = vmatprep.subr.mxu0 0.0
    %407 = vmatpush2.msra.mxu0 0.0
    %408 = vmatprep.subr.mxu0 0.0
    %409 = vmatpush2.msra.mxu0 0.0
    %410 = vmatprep.subr.mxu0 0.0
    %411 = vmatpush2.msra.mxu0 0.0
    %412 = vmatprep.subr.mxu0 0.0
    %413 = vmatpush2.msra.mxu0 0.0
    %414 = vmatprep.subr.mxu0 0.0
    %415 = vmatpush2.msra.mxu0 0.0
    %416 = vmatprep.subr.mxu0 0.0
    %417 = vmatpush2.msra.mxu0 0.0
    %418 = vmatprep.subr.mxu0 0.0
    %419 = vmatpush2.msra.mxu0 0.0
    %420 = vmatprep.subr.mxu0 0.0
    %421 = vmatpush2.msra.mxu0 0.0
    %422 = vmatprep.subr.mxu0 0.0
    %423 = vmatpush2.msra.mxu0 0.0
    %424 = vmatprep.subr.mxu0 0.0
    %425 = vmatpush2.msra.mxu0 0.0
    %426 = vmatprep.subr.mxu0 0.0
    %427 = vmatpush2.msra.mxu0 0.0
    %428 = vmatprep.subr.mxu0 0.0
    %429 = vmatpush2.msra.mxu0 0.0
    %430 = vmatprep.subr.mxu0 0.0
    %431 = vmatpush2.msra.mxu0 0.0
    %432 = vmatprep.mubr.f32.mxu0 0.0
    %v433 = vand.u32 %v51, 4294901760
    %434 = vmatmul.mubr.f32.gmra.mxu0 %v433
    %v435 = vpop.f32.mrf.mxu0
    %v436 = vadd.f32 %v359, %v435
    %v437 = vpop.f32.mrf.mxu0
    %438 = vdwg.mxu0
    %439 = vmatprep.subr.mxu0 0.0
    %440 = vmatpush1.msra.mxu0 0.0
    %441 = vmatprep.subr.mxu0 0.0
    %442 = vmatpush1.msra.mxu0 0.0
    %443 = vmatprep.subr.mxu0 0.0
    %444 = vmatpush1.msra.mxu0 0.0
    %445 = vmatprep.subr.mxu0 0.0
    %446 = vmatpush1.msra.mxu0 0.0
    %447 = vmatprep.subr.mxu0 0.0
    %448 = vmatpush1.msra.mxu0 0.0
    %449 = vmatprep.subr.mxu0 0.0
    %450 = vmatpush1.msra.mxu0 0.0
    %451 = vmatprep.subr.mxu0 0.0
    %452 = vmatpush1.msra.mxu0 0.0
    %453 = vmatprep.subr.mxu0 0.0
    %454 = vmatpush1.msra.mxu0 0.0
    %455 = vmatprep.subr.mxu0 0.0
    %456 = vmatpush1.msra.mxu0 0.0
    %457 = vmatprep.subr.mxu0 0.0
    %458 = vmatpush1.msra.mxu0 0.0
    %459 = vmatprep.subr.mxu0 0.0
    %460 = vmatpush1.msra.mxu0 0.0
    %461 = vmatprep.subr.mxu0 0.0
    %462 = vmatpush1.msra.mxu0 0.0
    %463 = vmatprep.subr.mxu0 0.0
    %464 = vmatpush1.msra.mxu0 0.0
    %465 = vmatprep.subr.mxu0 0.0
    %466 = vmatpush1.msra.mxu0 0.0
    %467 = vmatprep.subr.mxu0 0.0
    %v468 = vand.u32 %v41, 4294901760
    %469 = vmatpush1.msra.mxu0 %v468
    %470 = vmatprep.subr.mxu0 0.0
    %v471 = vand.u32 %v40, 4294901760
    %472 = vmatpush1.msra.mxu0 %v471
    %473 = vmatprep.subr.mxu0 0.0
    %474 = vmatpush2.msra.mxu0 0.0
    %475 = vmatprep.subr.mxu0 0.0
    %476 = vmatpush2.msra.mxu0 0.0
    %477 = vmatprep.subr.mxu0 0.0
    %478 = vmatpush2.msra.mxu0 0.0
    %479 = vmatprep.subr.mxu0 0.0
    %480 = vmatpush2.msra.mxu0 0.0
    %481 = vmatprep.subr.mxu0 0.0
    %482 = vmatpush2.msra.mxu0 0.0
    %483 = vmatprep.subr.mxu0 0.0
    %484 = vmatpush2.msra.mxu0 0.0
    %485 = vmatprep.subr.mxu0 0.0
    %486 = vmatpush2.msra.mxu0 0.0
    %487 = vmatprep.subr.mxu0 0.0
    %488 = vmatpush2.msra.mxu0 0.0
    %489 = vmatprep.subr.mxu0 0.0
    %490 = vmatpush2.msra.mxu0 0.0
    %491 = vmatprep.subr.mxu0 0.0
    %492 = vmatpush2.msra.mxu0 0.0
    %493 = vmatprep.subr.mxu0 0.0
    %494 = vmatpush2.msra.mxu0 0.0
    %495 = vmatprep.subr.mxu0 0.0
    %496 = vmatpush2.msra.mxu0 0.0
    %497 = vmatprep.subr.mxu0 0.0
    %498 = vmatpush2.msra.mxu0 0.0
    %499 = vmatprep.subr.mxu0 0.0
    %500 = vmatpush2.msra.mxu0 0.0
    %501 = vmatprep.subr.mxu0 0.0
    %502 = vmatpush2.msra.mxu0 0.0
    %503 = vmatprep.subr.mxu0 0.0
    %504 = vmatpush2.msra.mxu0 0.0
    %505 = vmatprep.mubr.f32.mxu0 0.0
    %v506 = vand.u32 %v51, 4294901760
    %507 = vmatmul.mubr.f32.gmra.mxu0 %v506
    %v508 = vpop.f32.mrf.mxu0
    %v509 = vadd.f32 %v436, %v508
    %v510 = vpop.f32.mrf.mxu0
    %511 = vdwg.mxu0
    %vm512 = vcmask 31744
    %v513 = vsel %vm512, %v509, -inf
    %514 = vmax.xlane.f32.xlu0 %v513
    %v515 = vpop.xlane.xlu0 %514
    %v516 = vsub.f32 %v509, %v515
    %v517 = vmul.f32 %v516, 1.442695
    %v518 = vpow.pop %v517
    %v519 = vsel %vm512, %v518, 0.0
    %520 = vadd.xlane.f32.xlu0 %v519
    %v521 = vpop.xlane.xlu0 %520
    %v522 = vrcp.pop %v521
    %v523 = vmul.f32 %v518, %v522
    %v524 = vadd.f32 %v523, 1e-12
    %v525 = vlog2.pop %v524
    %v526 = vmul.f32 %v525, 0.6931472
    %v527 = vrcp.pop 0.6931472
    %v528 = vmul.f32 %v526, %v527
    %v529 = vmul.f32 %v523, %v528
    %v530 = vsel %vm512, %v529, 0.0
    %531 = vadd.xlane.f32.xlu0 %v530
    %v532 = vpop.xlane.xlu0 %531
    %v533 = vsub.f32 0.0, %v532
    %534 = vset.pattern.permute.xlu0 0
    %535 = vperm.xlu0 %534, %v39
    %v536 = vpop.permute.xlu0 %535
    %v538 = vmul.f32 %v536, %v38
    %539 = vset.pattern.permute.xlu0 1
    %540 = vperm.xlu0 %539, %v39
    %v541 = vpop.permute.xlu0 %540
    %v543 = vmul.f32 %v541, %v38
    %544 = vset.pattern.permute.xlu0 2
    %545 = vperm.xlu0 %544, %v39
    %v546 = vpop.permute.xlu0 %545
    %v548 = vmul.f32 %v546, %v38
    %549 = vset.pattern.permute.xlu0 3
    %550 = vperm.xlu0 %549, %v39
    %v551 = vpop.permute.xlu0 %550
    %v553 = vmul.f32 %v551, %v38
    %554 = vset.pattern.permute.xlu0 4
    %555 = vperm.xlu0 %554, %v39
    %v556 = vpop.permute.xlu0 %555
    %v558 = vmul.f32 %v556, %v38
    %559 = vset.pattern.permute.xlu0 5
    %560 = vperm.xlu0 %559, %v39
    %v561 = vpop.permute.xlu0 %560
    %v563 = vmul.f32 %v561, %v38
    %564 = vset.pattern.permute.xlu0 6
    %565 = vperm.xlu0 %564, %v39
    %v566 = vpop.permute.xlu0 %565
    %v568 = vmul.f32 %v566, %v38
    %569 = vset.pattern.permute.xlu0 7
    %570 = vperm.xlu0 %569, %v39
    %v571 = vpop.permute.xlu0 %570
    %v573 = vmul.f32 %v571, %v38
    %574 = vset.pattern.permute.xlu0 8
    %575 = vperm.xlu0 %574, %v39
    %v576 = vpop.permute.xlu0 %575
    %v578 = vmul.f32 %v576, %v38
    %579 = vset.pattern.permute.xlu0 9
    %580 = vperm.xlu0 %579, %v39
    %v581 = vpop.permute.xlu0 %580
    %v583 = vmul.f32 %v581, %v38
    %584 = vset.pattern.permute.xlu0 10
    %585 = vperm.xlu0 %584, %v39
    %v586 = vpop.permute.xlu0 %585
    %v588 = vmul.f32 %v586, %v38
    %589 = vset.pattern.permute.xlu0 11
    %590 = vperm.xlu0 %589, %v39
    %v591 = vpop.permute.xlu0 %590
    %v593 = vmul.f32 %v591, %v38
    %594 = vset.pattern.permute.xlu0 12
    %595 = vperm.xlu0 %594, %v39
    %v596 = vpop.permute.xlu0 %595
    %v598 = vmul.f32 %v596, %v38
    %599 = vset.pattern.permute.xlu0 13
    %600 = vperm.xlu0 %599, %v39
    %v601 = vpop.permute.xlu0 %600
    %v603 = vmul.f32 %v601, %v38
    %604 = vset.pattern.permute.xlu0 14
    %605 = vperm.xlu0 %604, %v39
    %v606 = vpop.permute.xlu0 %605
    %v608 = vmul.f32 %v606, %v38
    %609 = vset.pattern.permute.xlu0 15
    %610 = vperm.xlu0 %609, %v39
    %v611 = vpop.permute.xlu0 %610
    %v613 = vmul.f32 %v611, %v38
    %615 = vrot.lane.b32.xlu0 %v538, 32
    %v616 = vpop.permute.xlu0 %615
    %619 = vrot.lane.b32.xlu0 %v543, 64
    %v620 = vpop.permute.xlu0 %619
    %623 = vrot.lane.b32.xlu0 %v548, 96
    %v624 = vpop.permute.xlu0 %623
    %627 = vrot.lane.b32.xlu0 %v558, 32
    %v628 = vpop.permute.xlu0 %627
    %631 = vrot.lane.b32.xlu0 %v563, 64
    %v632 = vpop.permute.xlu0 %631
    %635 = vrot.lane.b32.xlu0 %v568, 96
    %v636 = vpop.permute.xlu0 %635
    %639 = vrot.lane.b32.xlu0 %v578, 32
    %v640 = vpop.permute.xlu0 %639
    %643 = vrot.lane.b32.xlu0 %v583, 64
    %v644 = vpop.permute.xlu0 %643
    %647 = vrot.lane.b32.xlu0 %v588, 96
    %v648 = vpop.permute.xlu0 %647
    %651 = vrot.lane.b32.xlu0 %v598, 32
    %v652 = vpop.permute.xlu0 %651
    %655 = vrot.lane.b32.xlu0 %v603, 64
    %v656 = vpop.permute.xlu0 %655
    %659 = vrot.lane.b32.xlu0 %v608, 96
    %v660 = vpop.permute.xlu0 %659
    %vm662 = vcmask 261120
    %v663 = vsel %vm662, %v38, %v616
    %vm664 = vcmask 523264
    %v665 = vsel %vm664, %v663, %v620
    %vm666 = vcmask 785408
    %v667 = vsel %vm666, %v665, %v624
    %v668 = vsel %vm662, %v553, %v628
    %v669 = vsel %vm664, %v668, %v632
    %v670 = vsel %vm666, %v669, %v636
    %v671 = vsel %vm662, %v573, %v640
    %v672 = vsel %vm664, %v671, %v644
    %v673 = vsel %vm666, %v672, %v648
    %v674 = vsel %vm662, %v593, %v652
    %v675 = vsel %vm664, %v674, %v656
    %v676 = vsel %vm666, %v675, %v660
    %v677 = vpack.c.bf16 %v667, %v667
    %v678 = vpack.c.bf16 %v670, %v670
    %v679 = vpack.c.bf16 %v673, %v673
    %v680 = vpack.c.bf16 %v676, %v676
    %v681 = vpack.c.bf16 %v613, %v613
    %v682 = vld [vmem:[#allocation2] sm:$0xf]
    %v683 = vld [vmem:[#allocation2 + $0x4] sm:$0xf]
    %v684 = vld [vmem:[#allocation2 + $0x8] sm:$0xf]
    %v685 = vld [vmem:[#allocation2 + $0xc] sm:$0xf]
    %v686 = vld [vmem:[#allocation2 + $0x10] sm:$0xf]
    %v687 = vld [vmem:[#allocation2 + $0x14] sm:$0xf]
    %v688 = vld [vmem:[#allocation2 + $0x18] sm:$0xf]
    %v689 = vld [vmem:[#allocation2 + $0x1c] sm:$0xf]
    %v690 = vld [vmem:[#allocation2 + $0x20] sm:$0xf]
    %v691 = vld [vmem:[#allocation2 + $0x24] sm:$0xf]
    %v692 = vld [vmem:[#allocation2 + $0x28] sm:$0xf]
    %v693 = vld [vmem:[#allocation2 + $0x2c] sm:$0xf]
    %v694 = vld [vmem:[#allocation2 + $0x30] sm:$0xf]
    %v695 = vld [vmem:[#allocation2 + $0x34] sm:$0xf]
    %v696 = vld [vmem:[#allocation2 + $0x38] sm:$0xf]
    %v697 = vld [vmem:[#allocation2 + $0x3c] sm:$0xf]
    %v698 = vld [vmem:[#allocation2 + $0x40] sm:$0xf]
    %v699 = vld [vmem:[#allocation2 + $0x44] sm:$0xf]
    %v700 = vld [vmem:[#allocation2 + $0x48] sm:$0xf]
    %v701 = vld [vmem:[#allocation2 + $0x4c] sm:$0xf]
    %v702 = vld [vmem:[#allocation2 + $0x50] sm:$0xf]
    %v703 = vld [vmem:[#allocation2 + $0x54] sm:$0xf]
    %v704 = vld [vmem:[#allocation2 + $0x58] sm:$0xf]
    %v705 = vld [vmem:[#allocation2 + $0x5c] sm:$0xf]
    %v706 = vld [vmem:[#allocation2 + $0x60] sm:$0xf]
    %v707 = vld [vmem:[#allocation2 + $0x64] sm:$0xf]
    %v708 = vld [vmem:[#allocation2 + $0x68] sm:$0xf]
    %v709 = vld [vmem:[#allocation2 + $0x6c] sm:$0xf]
    %v710 = vld [vmem:[#allocation2 + $0x70] sm:$0xf]
    %v711 = vld [vmem:[#allocation2 + $0x74] sm:$0xf]
    %v712 = vld [vmem:[#allocation2 + $0x78] sm:$0xf]
    %v713 = vld [vmem:[#allocation2 + $0x7c] sm:$0xf]
    %v714 = vld [vmem:[#allocation2 + $0x80] sm:$0xf]
    %v715 = vld [vmem:[#allocation2 + $0x84] sm:$0xf]
    %v716 = vld [vmem:[#allocation2 + $0x88] sm:$0xf]
    %v717 = vld [vmem:[#allocation2 + $0x8c] sm:$0xf]
    %v718 = vld [vmem:[#allocation2 + $0x90] sm:$0xf]
    %v719 = vld [vmem:[#allocation2 + $0x94] sm:$0xf]
    %v720 = vld [vmem:[#allocation2 + $0x98] sm:$0xf]
    %v721 = vld [vmem:[#allocation2 + $0x9c] sm:$0xf]
    %v722 = vld [vmem:[#allocation2 + $0xa0] sm:$0xf]
    %v723 = vld [vmem:[#allocation2 + $0xa4] sm:$0xf]
    %v724 = vld [vmem:[#allocation2 + $0xa8] sm:$0xf]
    %v725 = vld [vmem:[#allocation2 + $0xac] sm:$0xf]
    %v726 = vld [vmem:[#allocation2 + $0xb0] sm:$0xf]
    %v727 = vld [vmem:[#allocation2 + $0xb4] sm:$0xf]
    %v728 = vld [vmem:[#allocation2 + $0xb8] sm:$0xf]
    %v729 = vld [vmem:[#allocation2 + $0xbc] sm:$0xf]
    %v730 = vld [vmem:[#allocation2 + $0xc0] sm:$0xf]
    %v731 = vld [vmem:[#allocation2 + $0xc4] sm:$0xf]
    %v732 = vld [vmem:[#allocation2 + $0xc8] sm:$0xf]
    %v733 = vld [vmem:[#allocation2 + $0xcc] sm:$0xf]
    %v734 = vld [vmem:[#allocation2 + $0xd0] sm:$0xf]
    %v735 = vld [vmem:[#allocation2 + $0xd4] sm:$0xf]
    %v736 = vld [vmem:[#allocation2 + $0xd8] sm:$0xf]
    %v737 = vld [vmem:[#allocation2 + $0xdc] sm:$0xf]
    %v738 = vld [vmem:[#allocation2 + $0xe0] sm:$0xf]
    %v739 = vld [vmem:[#allocation2 + $0xe4] sm:$0xf]
    %v740 = vld [vmem:[#allocation2 + $0xe8] sm:$0xf]
    %v741 = vld [vmem:[#allocation2 + $0xec] sm:$0xf]
    %v742 = vld [vmem:[#allocation2 + $0xf0] sm:$0xf]
    %v743 = vld [vmem:[#allocation2 + $0xf4] sm:$0xf]
    %v744 = vld [vmem:[#allocation2 + $0xf8] sm:$0xf]
    %v745 = vld [vmem:[#allocation2 + $0xfc] sm:$0xf]
    %v746 = vld [vmem:[#allocation2 + $0x100] sm:$0xf]
    %v747 = vld [vmem:[#allocation2 + $0x104] sm:$0xf]
    %v748 = vld [vmem:[#allocation2 + $0x108] sm:$0xf]
    %v749 = vld [vmem:[#allocation2 + $0x10c] sm:$0xf]
    %v750 = vld [vmem:[%s5] sm:$0x1]
    %v752 = vlaneseq
    %v753 = vshrl.u32 %v752, 7
    %v754 = vsub.s32 0, %v753
    %v755 = vrot.slane %v750, %v754
    %v825 = vunpack.c.l.b16 %v682
    %v826 = vunpack.c.l.b16 %v683
    %v827 = vunpack.c.l.b16 %v684
    %v828 = vunpack.c.l.b16 %v685
    %v829 = vunpack.c.l.b16 %v686
    %v830 = vunpack.c.l.b16 %v687
    %v831 = vunpack.c.l.b16 %v688
    %v832 = vunpack.c.l.b16 %v689
    %v833 = vunpack.c.l.b16 %v690
    %v834 = vunpack.c.l.b16 %v691
    %v835 = vunpack.c.l.b16 %v692
    %v836 = vunpack.c.l.b16 %v693
    %v837 = vunpack.c.l.b16 %v694
    %v838 = vunpack.c.l.b16 %v695
    %v839 = vunpack.c.l.b16 %v696
    %v840 = vunpack.c.l.b16 %v697
    %v841 = vunpack.c.l.b16 %v698
    %v842 = vunpack.c.l.b16 %v699
    %v843 = vunpack.c.l.b16 %v700
    %v844 = vunpack.c.l.b16 %v701
    %v845 = vunpack.c.l.b16 %v702
    %v846 = vunpack.c.l.b16 %v703
    %v847 = vunpack.c.l.b16 %v704
    %v848 = vunpack.c.l.b16 %v705
    %v849 = vunpack.c.l.b16 %v706
    %v850 = vunpack.c.l.b16 %v707
    %v851 = vunpack.c.l.b16 %v708
    %v852 = vunpack.c.l.b16 %v709
    %v853 = vunpack.c.l.b16 %v710
    %v854 = vunpack.c.l.b16 %v711
    %v855 = vunpack.c.l.b16 %v712
    %v856 = vunpack.c.l.b16 %v713
    %v857 = vunpack.c.l.b16 %v714
    %v858 = vunpack.c.l.b16 %v715
    %v859 = vunpack.c.l.b16 %v716
    %v860 = vunpack.c.l.b16 %v717
    %v861 = vunpack.c.l.b16 %v718
    %v862 = vunpack.c.l.b16 %v719
    %v863 = vunpack.c.l.b16 %v720
    %v864 = vunpack.c.l.b16 %v721
    %v865 = vunpack.c.l.b16 %v722
    %v866 = vunpack.c.l.b16 %v723
    %v867 = vunpack.c.l.b16 %v724
    %v868 = vunpack.c.l.b16 %v725
    %v869 = vunpack.c.l.b16 %v726
    %v870 = vunpack.c.l.b16 %v727
    %v871 = vunpack.c.l.b16 %v728
    %v872 = vunpack.c.l.b16 %v729
    %v873 = vunpack.c.l.b16 %v730
    %v874 = vunpack.c.l.b16 %v731
    %v875 = vunpack.c.l.b16 %v732
    %v876 = vunpack.c.l.b16 %v733
    %v877 = vunpack.c.l.b16 %v734
    %v878 = vunpack.c.l.b16 %v735
    %v879 = vunpack.c.l.b16 %v736
    %v880 = vunpack.c.l.b16 %v737
    %v881 = vunpack.c.l.b16 %v738
    %v882 = vunpack.c.l.b16 %v739
    %v883 = vunpack.c.l.b16 %v740
    %v884 = vunpack.c.l.b16 %v741
    %v885 = vunpack.c.l.b16 %v742
    %v886 = vunpack.c.l.b16 %v743
    %v887 = vunpack.c.l.b16 %v744
    %v888 = vunpack.c.l.b16 %v745
    %v889 = vunpack.c.l.b16 %v746
    %v890 = vunpack.c.l.b16 %v747
    %v891 = vunpack.c.l.b16 %v748
    %v892 = vunpack.c.l.b16 %v749
    %v893 = vpack.c.b16 %v826, %v825
    %v894 = vpack.c.b16 %v828, %v827
    %v895 = vpack.c.b16 %v830, %v829
    %v896 = vpack.c.b16 %v832, %v831
    %v897 = vpack.c.b16 %v834, %v833
    %v898 = vpack.c.b16 %v836, %v835
    %v899 = vpack.c.b16 %v838, %v837
    %v900 = vpack.c.b16 %v840, %v839
    %v901 = vpack.c.b16 %v842, %v841
    %v902 = vpack.c.b16 %v844, %v843
    %v903 = vpack.c.b16 %v846, %v845
    %v904 = vpack.c.b16 %v848, %v847
    %v905 = vpack.c.b16 %v850, %v849
    %v906 = vpack.c.b16 %v852, %v851
    %v907 = vpack.c.b16 %v854, %v853
    %v908 = vpack.c.b16 %v856, %v855
    %v909 = vpack.c.b16 %v858, %v857
    %v910 = vpack.c.b16 %v860, %v859
    %v911 = vpack.c.b16 %v862, %v861
    %v912 = vpack.c.b16 %v864, %v863
    %v913 = vpack.c.b16 %v866, %v865
    %v914 = vpack.c.b16 %v868, %v867
    %v915 = vpack.c.b16 %v870, %v869
    %v916 = vpack.c.b16 %v872, %v871
    %v917 = vpack.c.b16 %v874, %v873
    %v918 = vpack.c.b16 %v876, %v875
    %v919 = vpack.c.b16 %v878, %v877
    %v920 = vpack.c.b16 %v880, %v879
    %v921 = vpack.c.b16 %v882, %v881
    %v922 = vpack.c.b16 %v884, %v883
    %v923 = vpack.c.b16 %v886, %v885
    %v924 = vpack.c.b16 %v888, %v887
    %v925 = vpack.c.b16 %v890, %v889
    %v926 = vpack.c.b16 %v892, %v891
    %v962 = vsel %vm662, %v681, 0
    %964 = vmatprep.subr.bf16.mxu0 0
    %965 = vmatpush1.bf16.msra.mxu0 %v900
    %966 = vmatprep.subr.bf16.mxu0 0
    %967 = vmatpush1.bf16.msra.mxu0 %v899
    %968 = vmatprep.subr.bf16.mxu0 0
    %969 = vmatpush1.bf16.msra.mxu0 %v898
    %970 = vmatprep.subr.bf16.mxu0 0
    %971 = vmatpush1.bf16.msra.mxu0 %v897
    %972 = vmatprep.subr.bf16.mxu0 0
    %973 = vmatpush1.bf16.msra.mxu0 %v896
    %974 = vmatprep.subr.bf16.mxu0 0
    %975 = vmatpush1.bf16.msra.mxu0 %v895
    %976 = vmatprep.subr.bf16.mxu0 0
    %977 = vmatpush1.bf16.msra.mxu0 %v894
    %978 = vmatprep.subr.bf16.mxu0 0
    %979 = vmatpush1.bf16.msra.mxu0 %v893
    %980 = vmatprep.subr.bf16.mxu0 0
    %981 = vmatpush2.bf16.msra.mxu0 %v908
    %982 = vmatprep.subr.bf16.mxu0 0
    %983 = vmatpush2.bf16.msra.mxu0 %v907
    %984 = vmatprep.subr.bf16.mxu0 0
    %985 = vmatpush2.bf16.msra.mxu0 %v906
    %986 = vmatprep.subr.bf16.mxu0 0
    %987 = vmatpush2.bf16.msra.mxu0 %v905
    %988 = vmatprep.subr.bf16.mxu0 0
    %989 = vmatpush2.bf16.msra.mxu0 %v904
    %990 = vmatprep.subr.bf16.mxu0 0
    %991 = vmatpush2.bf16.msra.mxu0 %v903
    %992 = vmatprep.subr.bf16.mxu0 0
    %993 = vmatpush2.bf16.msra.mxu0 %v902
    %994 = vmatprep.subr.bf16.mxu0 0
    %995 = vmatpush2.bf16.msra.mxu0 %v901
    %996 = vmatprep.mubr.bf16.mxu0 %v678
    %997 = vmatmul.mubr.bf16.gmra.mxu0 %v677
    %v998 = vpop.f32.mrf.mxu0
    %v999 = vadd.f32 %v755, %v998
    %v1000 = vpop.f32.mrf.mxu0
    %v1001 = vpop.f32.mrf.mxu0
    %v1002 = vpop.f32.mrf.mxu0
    %1003 = vdwg.mxu0
    %1004 = vmatprep.subr.bf16.mxu0 0
    %1005 = vmatpush1.bf16.msra.mxu0 %v916
    %1006 = vmatprep.subr.bf16.mxu0 0
    %1007 = vmatpush1.bf16.msra.mxu0 %v915
    %1008 = vmatprep.subr.bf16.mxu0 0
    %1009 = vmatpush1.bf16.msra.mxu0 %v914
    %1010 = vmatprep.subr.bf16.mxu0 0
    %1011 = vmatpush1.bf16.msra.mxu0 %v913
    %1012 = vmatprep.subr.bf16.mxu0 0
    %1013 = vmatpush1.bf16.msra.mxu0 %v912
    %1014 = vmatprep.subr.bf16.mxu0 0
    %1015 = vmatpush1.bf16.msra.mxu0 %v911
    %1016 = vmatprep.subr.bf16.mxu0 0
    %1017 = vmatpush1.bf16.msra.mxu0 %v910
    %1018 = vmatprep.subr.bf16.mxu0 0
    %1019 = vmatpush1.bf16.msra.mxu0 %v909
    %1020 = vmatprep.subr.bf16.mxu0 0
    %1021 = vmatpush2.bf16.msra.mxu0 %v924
    %1022 = vmatprep.subr.bf16.mxu0 0
    %1023 = vmatpush2.bf16.msra.mxu0 %v923
    %1024 = vmatprep.subr.bf16.mxu0 0
    %1025 = vmatpush2.bf16.msra.mxu0 %v922
    %1026 = vmatprep.subr.bf16.mxu0 0
    %1027 = vmatpush2.bf16.msra.mxu0 %v921
    %1028 = vmatprep.subr.bf16.mxu0 0
    %1029 = vmatpush2.bf16.msra.mxu0 %v920
    %1030 = vmatprep.subr.bf16.mxu0 0
    %1031 = vmatpush2.bf16.msra.mxu0 %v919
    %1032 = vmatprep.subr.bf16.mxu0 0
    %1033 = vmatpush2.bf16.msra.mxu0 %v918
    %1034 = vmatprep.subr.bf16.mxu0 0
    %1035 = vmatpush2.bf16.msra.mxu0 %v917
    %1036 = vmatprep.mubr.bf16.mxu0 %v680
    %1037 = vmatmul.mubr.bf16.gmra.mxu0 %v679
    %v1038 = vpop.f32.mrf.mxu0
    %v1039 = vadd.f32 %v999, %v1038
    %v1040 = vpop.f32.mrf.mxu0
    %v1041 = vpop.f32.mrf.mxu0
    %v1042 = vpop.f32.mrf.mxu0
    %1043 = vdwg.mxu0
    %1044 = vmatprep.subr.bf16.mxu0 0
    %1045 = vmatpush1.bf16.msra.mxu0 0
    %1046 = vmatprep.subr.bf16.mxu0 0
    %1047 = vmatpush1.bf16.msra.mxu0 0
    %1048 = vmatprep.subr.bf16.mxu0 0
    %1049 = vmatpush1.bf16.msra.mxu0 0
    %1050 = vmatprep.subr.bf16.mxu0 0
    %1051 = vmatpush1.bf16.msra.mxu0 0
    %1052 = vmatprep.subr.bf16.mxu0 0
    %1053 = vmatpush1.bf16.msra.mxu0 0
    %1054 = vmatprep.subr.bf16.mxu0 0
    %1055 = vmatpush1.bf16.msra.mxu0 0
    %1056 = vmatprep.subr.bf16.mxu0 0
    %1057 = vmatpush1.bf16.msra.mxu0 %v926
    %1058 = vmatprep.subr.bf16.mxu0 0
    %1059 = vmatpush1.bf16.msra.mxu0 %v925
    %1060 = vmatprep.subr.bf16.mxu0 0
    %1061 = vmatpush2.bf16.msra.mxu0 0
    %1062 = vmatprep.subr.bf16.mxu0 0
    %1063 = vmatpush2.bf16.msra.mxu0 0
    %1064 = vmatprep.subr.bf16.mxu0 0
    %1065 = vmatpush2.bf16.msra.mxu0 0
    %1066 = vmatprep.subr.bf16.mxu0 0
    %1067 = vmatpush2.bf16.msra.mxu0 0
    %1068 = vmatprep.subr.bf16.mxu0 0
    %1069 = vmatpush2.bf16.msra.mxu0 0
    %1070 = vmatprep.subr.bf16.mxu0 0
    %1071 = vmatpush2.bf16.msra.mxu0 0
    %1072 = vmatprep.subr.bf16.mxu0 0
    %1073 = vmatpush2.bf16.msra.mxu0 0
    %1074 = vmatprep.subr.bf16.mxu0 0
    %1075 = vmatpush2.bf16.msra.mxu0 0
    %1076 = vmatprep.mubr.bf16.mxu0 0
    %1077 = vmatmul.mubr.bf16.gmra.mxu0 %v962
    %v1078 = vpop.f32.mrf.mxu0
    %v1079 = vadd.f32 %v1039, %v1078
    %v1080 = vpop.f32.mrf.mxu0
    %v1081 = vpop.f32.mrf.mxu0
    %v1082 = vpop.f32.mrf.mxu0
    %1083 = vdwg.mxu0
    %1085 = vset.pattern.permute.xlu0 0
    %1086 = vperm.xlu0 %1085, %v523
    %v1087 = vpop.permute.xlu0 %1086
    %1089 = vset.pattern.permute.xlu0 1
    %1090 = vperm.xlu0 %1089, %v523
    %v1091 = vpop.permute.xlu0 %1090
    %1093 = vset.pattern.permute.xlu0 2
    %1094 = vperm.xlu0 %1093, %v523
    %v1095 = vpop.permute.xlu0 %1094
    %1097 = vset.pattern.permute.xlu0 3
    %1098 = vperm.xlu0 %1097, %v523
    %v1099 = vpop.permute.xlu0 %1098
    %v1101 = vsel %vm662, %v1087, %v1091
    %v1102 = vsel %vm664, %v1101, %v1095
    %v1103 = vsel %vm666, %v1102, %v1099
    %v1104 = vmul.f32 %v1103, %v1079
    %1105 = vrot.lane.b32.xlu0 %v1104, 64
    %v1106 = vpop.permute.xlu0 %1105
    %v1107 = vadd.f32 %v1104, %v1106
    %1108 = vrot.lane.b32.xlu0 %v1107, 96
    %v1109 = vpop.permute.xlu0 %1108
    %v1110 = vadd.f32 %v1107, %v1109
    %v1111 = vsel %vm662, %v1110, %v533
    %1112 = vst [vmem:[%s6] sm:$0xff] %v1111
    // Predicated region
    $region30: #{mixture_of_experts.1} parent=1 // pred_check
      _
    $region31: #{mixture_of_experts.1} parent=1 // pred_check_branch
      %1114 = sbr.rel (0) target = $region33
    $region32: #{mixture_of_experts.1} parent=1 // pred_region
      _
    $region33: #{mixture_of_experts.1} parent=1 // pred_fallthru
      _
    // Predicated region
    $region34: #{mixture_of_experts.1} parent=1 // pred_check
      _
    $region35: #{mixture_of_experts.1} parent=1 // pred_check_branch
      %1116 = sbr.rel (0) target = $region37
    $region36: #{mixture_of_experts.1} parent=1 // pred_region
      _
    $region37: #{mixture_of_experts.1} parent=1 // pred_fallthru
      _
    %1117 = vsyncpa [#allocation3], 1

</llo_original>
